<compile_context>
chip_gen: v5e
topology: v5e:2x2
jax: 0.10.0
libtpu: 0.0.40
codegen_flags: <defaults>
</compile_context>

<pallas_src>
import functools

import jax
import jax.numpy as jnp
from jax.experimental import pallas as pl
from jax.experimental.pallas import tpu as pltpu

IN_FEATURES = 64
OUT_FEATURES = 128
CLAMP_MIN = -1.0
CLAMP_MAX = 1.0
TILE_B = 512  # row tile for the gridded (large-batch) path


def linear_clamp_kernel(x_ref, w_ref, b_ref, o_ref):
    # MXU matmul with f32 accumulation (works for f32 or bf16 operands).
    y = jnp.dot(x_ref[...], w_ref[...], preferred_element_type=jnp.float32)
    # Bias (already f32) + clamp epilogue in f32; cast only at the store.
    y = jnp.clip(y + b_ref[...], CLAMP_MIN, CLAMP_MAX)
    o_ref[...] = y.astype(o_ref.dtype)


def _cost(B, K, N, x_dtype, w_dtype):
    flops = 2 * B * K * N
    bytes_accessed = (
        B * K * jnp.dtype(x_dtype).itemsize
        + K * N * jnp.dtype(w_dtype).itemsize
        + N * 4
        + B * N * jnp.dtype(x_dtype).itemsize
    )
    return pl.CostEstimate(flops=flops, transcendentals=0,
                           bytes_accessed=bytes_accessed)


@functools.partial(jax.jit, static_argnames=("tile_b",))
def linear_clamp(x, w, b, *, tile_b=TILE_B):
    """clamp(x @ w + b, CLAMP_MIN, CLAMP_MAX). x:(B,K), w:(K,N), b:(N,)|(1,N)."""
    B, K = x.shape
    K2, N = w.shape
    assert K == K2, (K, K2)
    # Bias: accept (N,) or (1,N); keep it f32 so the kernel epilogue is pure f32.
    b = jnp.asarray(b, dtype=jnp.float32).reshape(1, N)

    if B <= tile_b:
        # --- small-B / decode path: single tile, no grid, no pipelining ---
        return pl.pallas_call(
            linear_clamp_kernel,
            out_shape=jax.ShapeDtypeStruct((B, N), x.dtype),
            in_specs=[
                pl.BlockSpec(memory_space=pltpu.MemorySpace.VMEM),
                pl.BlockSpec(memory_space=pltpu.MemorySpace.VMEM),
                pl.BlockSpec(memory_space=pltpu.MemorySpace.VMEM),
            ],
            out_specs=pl.BlockSpec(memory_space=pltpu.MemorySpace.VMEM),
            cost_estimate=_cost(B, K, N, x.dtype, w.dtype),
        )(x, w, b)

    # --- large-B path: 1-D grid over rows, W/b resident, x/y pipelined ---
    B_pad = pl.cdiv(B, tile_b) * tile_b
    x_pad = x if B_pad == B else jnp.pad(x, ((0, B_pad - B), (0, 0)))

    out = pl.pallas_call(
        linear_clamp_kernel,
        out_shape=jax.ShapeDtypeStruct((B_pad, N), x.dtype),
        grid=(B_pad // tile_b,),
        in_specs=[
            pl.BlockSpec((tile_b, K), lambda i: (i, 0)),   # x: streamed tiles
            pl.BlockSpec((K, N), lambda i: (0, 0)),        # W: VMEM-resident
            pl.BlockSpec((1, N), lambda i: (0, 0)),        # b: VMEM-resident
        ],
        out_specs=pl.BlockSpec((tile_b, N), lambda i: (i, 0)),
        compiler_params=pltpu.CompilerParams(
            dimension_semantics=("parallel",),             # 2 TCs on v7x
        ),
        cost_estimate=_cost(B_pad, K, N, x.dtype, w.dtype),
    )(x_pad, w, b)
    return out[:B]


if __name__ == "__main__":
    key = jax.random.PRNGKey(0)
    kx, kw, kb, kbig = jax.random.split(key, 4)

    # Deterministic synthetic parameters (not a checkpoint load).
    x1 = jax.random.normal(kx, (1, IN_FEATURES), dtype=jnp.float32)
    # PyTorch Linear weight is (OUT, IN); we store its transpose (IN, OUT).
    w = jax.random.normal(kw, (IN_FEATURES, OUT_FEATURES), dtype=jnp.float32) * 0.1
    b = jax.random.normal(kb, (OUT_FEATURES,), dtype=jnp.float32) * 0.1

    def ref_fn(xv, wv, bv):
        y = xv.astype(jnp.float32) @ wv.astype(jnp.float32) + bv.reshape(1, -1)
        return jnp.clip(y, CLAMP_MIN, CLAMP_MAX)

    # --- 1) f32 path at the module's literal shape (1, 64) ---
    out = jax.block_until_ready(linear_clamp(x1, w, b))
    assert out.shape == (1, OUT_FEATURES)
    assert jnp.allclose(out, ref_fn(x1, w, b), atol=1e-5, rtol=1e-5)

    # --- 2) bf16 feed path (v6e/v7x default: bf16 x/W, f32 bias + accum) ---
    x_bf, w_bf = x1.astype(jnp.bfloat16), w.astype(jnp.bfloat16)
    out_bf = jax.block_until_ready(linear_clamp(x_bf, w_bf, b))
    ref_bf = ref_fn(x_bf, w_bf, b).astype(jnp.bfloat16)
    assert out_bf.shape == (1, OUT_FEATURES)
    assert jnp.allclose(out_bf.astype(jnp.float32), ref_bf.astype(jnp.float32),
                        atol=2e-2)

    # --- 3) batched gridded path (ragged B, exercises padding + parallel grid) ---
    Bbig = 1100
    xb = jax.random.normal(kbig, (Bbig, IN_FEATURES), dtype=jnp.float32)
    out_big = jax.block_until_ready(linear_clamp(xb, w, b))
    assert out_big.shape == (Bbig, OUT_FEATURES)
    assert jnp.allclose(out_big, ref_fn(xb, w, b), atol=1e-4, rtol=1e-4)

    print("KERNEL_OK")
</pallas_src>

<mosaic_0001>
module attributes {stable_mosaic.version = 11 : i64} {
  func.func @linear_clamp_kernel(%arg0: memref<1x64xf32, #tpu.memory_space<vmem>>, %arg1: memref<64x128xf32, #tpu.memory_space<vmem>>, %arg2: memref<1x128xf32, #tpu.memory_space<vmem>>, %arg3: memref<1x128xf32, #tpu.memory_space<vmem>>) attributes {dimension_semantics = [], scalar_prefetch = 0 : i64, scratch_operands = 0 : i64, tpu.core_type = #tpu.core_type<tc>} {
    %c0 = arith.constant 0 : index
    %c0_0 = arith.constant 0 : index
    %0 = vector.load %arg0[%c0, %c0_0] : memref<1x64xf32, #tpu.memory_space<vmem>>, vector<1x64xf32>
    %c0_1 = arith.constant 0 : index
    %c0_2 = arith.constant 0 : index
    %1 = vector.load %arg1[%c0_1, %c0_2] : memref<64x128xf32, #tpu.memory_space<vmem>>, vector<64x128xf32>
    %cst = arith.constant dense<0.000000e+00> : vector<1x128xf32>
    %2 = tpu.matmul %0, %1, %cst {dimension_numbers = #tpu.dot_dimension_numbers<[1], [0], [0], [1], [0, 0, 1, 1], [], []>} : vector<1x64xf32>, vector<64x128xf32>, vector<1x128xf32> -> vector<1x128xf32>
    %c0_3 = arith.constant 0 : index
    %c0_4 = arith.constant 0 : index
    %3 = vector.load %arg2[%c0_3, %c0_4] : memref<1x128xf32, #tpu.memory_space<vmem>>, vector<1x128xf32>
    %4 = arith.addf %2, %3 : vector<1x128xf32>
    %cst_5 = arith.constant -1.000000e+00 : f32
    %cst_6 = arith.constant 1.000000e+00 : f32
    %5 = vector.broadcast %cst_5 : f32 to vector<1x128xf32>
    %6 = arith.maximumf %5, %4 : vector<1x128xf32>
    %7 = vector.broadcast %cst_6 : f32 to vector<1x128xf32>
    %8 = arith.minimumf %7, %6 : vector<1x128xf32>
    %c0_7 = arith.constant 0 : index
    %c0_8 = arith.constant 0 : index
    %9 = vector.load %arg3[%c0_7, %c0_8] : memref<1x128xf32, #tpu.memory_space<vmem>>, vector<1x128xf32>
    tpu.vector_store %arg3[%c0_7, %c0_8], %8 {strides = array<i32>} : memref<1x128xf32, #tpu.memory_space<vmem>>, vector<1x128xf32>,
    return
  }
}

</mosaic_0001>

<llo_original>
// kernel: linear_clamp.1
$region0: #{linear_clamp.1}
  #allocation0 [shape = 'u32[]', space=smem, size = 0x4, offset = 0x4, fixed_abs, tag = 'smem constant byte address 0x4 - core index']
  #allocation1 [shape = 'u32[72,128]{1,0:T(1,128)}', space=vmem, size = 0x9000, scoped, tag = 'internal scratch']
  %s0 = inlined_call_operand.hbm [shape: f32[1,64], index: 0, kind: input, shape index: {}]
  %s1 = inlined_call_operand.hbm [shape: f32[64,128], index: 1, kind: input, shape index: {}]
  %s2 = inlined_call_operand.vmem [shape: f32[1,128], index: 2, kind: input, shape index: {}]
  %s3 = inlined_call_operand.hbm [shape: f32[1,128], index: 3, kind: output, shape index: {}]
  %s4 = sld [smem:[#allocation0]]
  $region30: #{linear_clamp.1} parent=0
    _
  %s6 = ssub.s32 1, %s4
  %s7 = scalar_select 0, %s6, %s4
  $region1: #{linear_clamp.1} parent=0
    #allocation2 [shape = 'u8[512]{0}', space=vmem, size = 0x400, scoped, tag = 'input window, operand 0, single buffered']
    #allocation3 [shape = 's32[1]{0}', space=sflag, size = 0x4, scoped, tag = 'scoped memory for linear_clamp.1']
    #allocation4 [shape = 's32[1]{0}', space=sflag, size = 0x4, scoped, tag = 'scoped memory for linear_clamp.1']
    #allocation5 [shape = 'u8[32768]{0}', space=vmem, size = 0x8000, scoped, tag = 'input window, operand 1, single buffered']
    #allocation6 [shape = 's32[1]{0}', space=sflag, size = 0x4, scoped, tag = 'scoped memory for linear_clamp.1']
    #allocation7 [shape = 'u8[512]{0}', space=vmem, size = 0x400, scoped, tag = 'output window, operand 0, single buffered']
    %8 = vsyncpa [#allocation3], 0
    %9 = vsyncpa [#allocation6], 0
    %10 = vsyncpa [#allocation4], 0
    // Predicated region
    $region2: #{linear_clamp.1} parent=1 // pred_check
      _
    $region3: #{linear_clamp.1} parent=1 // pred_check_branch
      %12 = sbr.rel (0) target = $region5
    $region4: #{linear_clamp.1} parent=1 // pred_region
      %14 = vsyncadd [#allocation3], 0
      %s16 = sshll.u32 %s0, 4
      %s17 = int_to_ptr.hbm [resolvable:$true] %s16
      %s18 = sshll.u32 [#allocation2], 4
      %s19 = int_to_ptr.vmem [resolvable:$true] %s18
      %21 = dma.hbm_to_vmem [thread:$0]  %s17, 16, %s19, [#allocation3]
    $region5: #{linear_clamp.1} parent=1 // pred_fallthru
      _
    // Predicated region
    $region6: #{linear_clamp.1} parent=1 // pred_check
      _
    $region7: #{linear_clamp.1} parent=1 // pred_check_branch
      %23 = sbr.rel (0) target = $region9
    $region8: #{linear_clamp.1} parent=1 // pred_region
      %25 = vsyncadd [#allocation6], 0
      %s26 = sshll.u32 %s1, 4
      %s27 = int_to_ptr.hbm [resolvable:$true] %s26
      %s28 = sshll.u32 [#allocation5], 4
      %s29 = int_to_ptr.vmem [resolvable:$true] %s28
      %34 = dma.hbm_to_vmem [thread:$0]  %s27, 1024, %s29, [#allocation6], 128, 128, 8
    $region9: #{linear_clamp.1} parent=1 // pred_fallthru
      _
    // Predicated region
    $region10: #{linear_clamp.1} parent=1 // pred_check
      _
    $region11: #{linear_clamp.1} parent=1 // pred_check_branch
      %36 = sbr.rel (0) target = $region13
    $region12: #{linear_clamp.1} parent=1 // pred_region
      _
    $region13: #{linear_clamp.1} parent=1 // pred_fallthru
      _
    // Predicated region
    $region14: #{linear_clamp.1} parent=1 // pred_check
      _
    $region15: #{linear_clamp.1} parent=1 // pred_check_branch
      %38 = sbr.rel (0) target = $region17
    $region16: #{linear_clamp.1} parent=1 // pred_region
      %40 = dma.done [#allocation3], 16
    $region17: #{linear_clamp.1} parent=1 // pred_fallthru
      _
    // Predicated region
    $region18: #{linear_clamp.1} parent=1 // pred_check
      _
    $region19: #{linear_clamp.1} parent=1 // pred_check_branch
      %42 = sbr.rel (0) target = $region21
    $region20: #{linear_clamp.1} parent=1 // pred_region
      %44 = dma.done [#allocation6], 1024
    $region21: #{linear_clamp.1} parent=1 // pred_fallthru
      _
    %v45 = vld [vmem:[#allocation2] sm:$0x1]
    %v46 = vld [vmem:[#allocation5] sm:$0xff]
    %v47 = vld [vmem:[#allocation5 + $0x8] sm:$0xff]
    %v48 = vld [vmem:[#allocation5 + $0x10] sm:$0xff]
    %v49 = vld [vmem:[#allocation5 + $0x18] sm:$0xff]
    %v50 = vld [vmem:[#allocation5 + $0x20] sm:$0xff]
    %v51 = vld [vmem:[#allocation5 + $0x28] sm:$0xff]
    %v52 = vld [vmem:[#allocation5 + $0x30] sm:$0xff]
    %v53 = vld [vmem:[#allocation5 + $0x38] sm:$0xff]
    %v54 = vld [vmem:[%s2] sm:$0x1]
    %vm55 = vcmask 523264
    %v57 = vsel %vm55, %v45, 0
    %59 = vmatpush.msra.mxu0 0.0
    %60 = vmatpush.msra.mxu0 0.0
    %61 = vmatpush.msra.mxu0 0.0
    %62 = vmatpush.msra.mxu0 0.0
    %63 = vmatpush.msra.mxu0 0.0
    %64 = vmatpush.msra.mxu0 0.0
    %65 = vmatpush.msra.mxu0 0.0
    %66 = vmatpush.msra.mxu0 0.0
    %67 = vmatpush.msra.mxu0 %v53
    %68 = vmatpush.msra.mxu0 %v52
    %69 = vmatpush.msra.mxu0 %v51
    %70 = vmatpush.msra.mxu0 %v50
    %71 = vmatpush.msra.mxu0 %v49
    %72 = vmatpush.msra.mxu0 %v48
    %73 = vmatpush.msra.mxu0 %v47
    %74 = vmatpush.msra.mxu0 %v46
    %75 = vmatmul.f32.gmra.mxu0 %v57
    %v76 = vpop.f32.mrf.mxu0
    %v77 = vadd.f32 %v54, %v76
    %78 = vdwg.mxu0
    %v79 = vmax.f32 %v77, -1.0
    %v80 = vmin.f32 %v79, 1.0
    %81 = vst [vmem:[#allocation7] sm:$0x1] %v80
    // Predicated region
    $region22: #{linear_clamp.1} parent=1 // pred_check
      _
    $region23: #{linear_clamp.1} parent=1 // pred_check_branch
      %83 = sbr.rel (0) target = $region25
    $region24: #{linear_clamp.1} parent=1 // pred_region
      %85 = vsyncadd [#allocation4], 0
      %s87 = sshll.u32 [#allocation7], 4
      %s88 = int_to_ptr.vmem [resolvable:$true] %s87
      %s89 = sshll.u32 %s3, 4
      %s90 = int_to_ptr.hbm [resolvable:$true] %s89
      %92 = dma.vmem_to_hbm [thread:$0]  %s88, 16, %s90, [#allocation4]
    $region25: #{linear_clamp.1} parent=1 // pred_fallthru
      _
    // Predicated region
    $region26: #{linear_clamp.1} parent=1 // pred_check
      _
    $region27: #{linear_clamp.1} parent=1 // pred_check_branch
      %94 = sbr.rel (0) target = $region29
    $region28: #{linear_clamp.1} parent=1 // pred_region
      %96 = dma.done [#allocation4], 16
    $region29: #{linear_clamp.1} parent=1 // pred_fallthru
      _
    %97 = vsyncpa [#allocation3], 1
    %98 = vsyncpa [#allocation6], 1
    %99 = vsyncpa [#allocation4], 1

</llo_original>
